<compile_context>
chip_gen: v5e
topology: v5e:2x2
jax: 0.10.0
libtpu: 0.0.40
codegen_flags: <defaults>
</compile_context>

<pallas_src>
import jax
import jax.numpy as jnp
from jax.experimental import pallas as pl
from jax.experimental.pallas import tpu as pltpu


def _exp_sim_kernel(k_ref, x_ref, o_ref):
    # k_ref: (1, 1) f32 scalar in SMEM; x_ref / o_ref: (tr, lane_w) VMEM tiles.
    k = k_ref[0, 0]
    x = x_ref[...].astype(jnp.float32)
    o_ref[...] = jnp.exp(-k * jnp.abs(x)).astype(o_ref.dtype)


def _round_down(a, b):
    return (a // b) * b


def _round_up(a, b):
    return -(-a // b) * b


def _pick_tile_rows(rows, sublanes, lane_w, itemsize):
    """Rows per block: ~1 MiB blocks (double-buffered in+out ~= 4 MiB, safe on
    v5e's 16 MiB / v7x's 32 MiB scoped VMEM), multiple of the dtype sublane
    pack, and >= ~8 grid steps when that doesn't shrink blocks below ~256 KiB
    (helps v7x's 2 TensorCores share the grid)."""
    if rows <= sublanes:
        return rows
    max_tr = _round_down(rows, sublanes)
    tr = max(sublanes, min(_round_down((1 << 20) // (lane_w * itemsize), sublanes), max_tr))
    min_tr = max(sublanes, _round_down((256 << 10) // (lane_w * itemsize), sublanes))
    tr_8steps = _round_up(-(-rows // 8), sublanes)
    if tr_8steps < tr:
        tr = max(min_tr, tr_8steps)
    return tr


def _run_slab(x2d, k_arr, dtype, itemsize, sublanes):
    rows, lane_w = x2d.shape
    tr = _pick_tile_rows(rows, sublanes, lane_w, itemsize)
    n_elems = rows * lane_w
    return pl.pallas_call(
        _exp_sim_kernel,
        out_shape=jax.ShapeDtypeStruct((rows, lane_w), dtype),
        grid=(pl.cdiv(rows, tr),),
        in_specs=[
            pl.BlockSpec(memory_space=pltpu.SMEM),             # k: whole (1,1) scalar
            pl.BlockSpec((tr, lane_w), lambda i: (i, 0)),      # x tile
        ],
        out_specs=pl.BlockSpec((tr, lane_w), lambda i: (i, 0)),
        compiler_params=pltpu.CompilerParams(dimension_semantics=("parallel",)),
        cost_estimate=pl.CostEstimate(
            flops=2 * n_elems,
            transcendentals=n_elems,
            bytes_accessed=2 * n_elems * itemsize,
        ),
    )(k_arr, x2d)


def exponential_similarity(x, k):
    """Compute exp(-k * |x|) elementwise with a Pallas TPU kernel.

    x: any-shaped float array (e.g. NCHW).
    k: scalar (float or 0-d/1-elem array), the learnable parameter.
    """
    orig_shape = x.shape
    dtype = x.dtype
    n = x.size
    itemsize = jnp.dtype(dtype).itemsize
    # dtype-aware sublane pack: 8 for f32, 16 for bf16, 32 for int8/fp8
    sublanes = max(8, 32 // itemsize)

    k_arr = jnp.asarray(k, dtype=jnp.float32).reshape(1, 1)

    if n == 0:
        return x

    x_flat = x.reshape(-1)

    # Tiny input: a single full-extent block (block dims equal to array dims are legal).
    if n < 128:
        y2d = _run_slab(x_flat.reshape(1, n), k_arr, dtype, itemsize, sublanes)
        return y2d.reshape(orig_shape)

    # Wide, lane-dense slab: big last dim => unmasked full-width vector stores
    # and large contiguous DMA rows.
    lane_w = 1024 if n >= 1024 else (512 if n >= 512 else (256 if n >= 256 else 128))
    n_main = (n // lane_w) * lane_w
    rows = n_main // lane_w

    if n_main == n:
        main_flat = x_flat            # zero-copy reshape of the contiguous buffer
        tail = None
    else:
        # Kernel on the aligned prefix; the < lane_w tail is plain JAX.
        # This avoids materializing a padded copy of x in HBM.
        main_flat = jax.lax.slice(x_flat, (0,), (n_main,))
        tail = jax.lax.slice(x_flat, (n_main,), (n,))

    y_main = _run_slab(main_flat.reshape(rows, lane_w), k_arr, dtype, itemsize, sublanes)
    y_main = y_main.reshape(-1)

    if tail is None:
        y_flat = y_main
    else:
        y_tail = jnp.exp(-k_arr[0, 0] * jnp.abs(tail.astype(jnp.float32))).astype(dtype)
        y_flat = jnp.concatenate([y_main, y_tail])

    return y_flat.reshape(orig_shape)


class ExponentialSimilarityPallas:
    """JAX/Pallas equivalent of the PyTorch ExponentialSimilarity module (forward pass)."""

    def __init__(self, starting_value=None, requires_grad=True):
        # k = 1.0 if starting_value is None else starting_value (matches nn.Parameter init).
        self.param = jnp.asarray(
            [1.0 if starting_value is None else float(starting_value)],
            dtype=jnp.float32,
        )
        # TODO(synk): forward-only kernel; learnable-parameter autograd not wired up here.
        self.requires_grad = requires_grad

    def __call__(self, x):
        return exponential_similarity(x, self.param[0])


if __name__ == "__main__":
    key = jax.random.PRNGKey(0)
    # NCHW input, small shape: batch=2, channels=4, spatial=16x16.
    x = jax.random.normal(key, (2, 4, 16, 16), dtype=jnp.float32)

    module = ExponentialSimilarityPallas()  # k = 1.0
    y = jax.block_until_ready(module(x))

    # Reference check in plain JAX.
    y_ref = jnp.exp(-module.param[0] * jnp.abs(x))
    assert y.shape == x.shape and y.dtype == x.dtype
    assert jnp.allclose(y, y_ref, atol=1e-6, rtol=1e-6)

    print("KERNEL_OK")
</pallas_src>

<mosaic_0001>
module attributes {stable_mosaic.version = 11 : i64} {
  func.func @_exp_sim_kernel(%arg0: i32, %arg1: memref<1x1xf32, #tpu.memory_space<smem>>, %arg2: memref<2x1024xf32, #tpu.memory_space<vmem>>, %arg3: memref<2x1024xf32, #tpu.memory_space<vmem>>) attributes {dimension_semantics = [#tpu.dimension_semantics<parallel>], iteration_bounds = array<i64: 1>, scalar_prefetch = 0 : i64, scratch_operands = 0 : i64, tpu.core_type = #tpu.core_type<tc>, window_params = [{transform_indices = @transform_0, window_bounds = array<i64: 1, 1>}, {transform_indices = @transform_1, window_bounds = array<i64: 2, 1024>}, {transform_indices = @transform_2, window_bounds = array<i64: 2, 1024>}]} {
    %c0 = arith.constant 0 : index
    %c0_0 = arith.constant 0 : index
    %0 = memref.load %arg1[%c0, %c0_0] : memref<1x1xf32, #tpu.memory_space<smem>>
    %c0_1 = arith.constant 0 : index
    %c0_2 = arith.constant 0 : index
    %1 = vector.load %arg2[%c0_1, %c0_2] : memref<2x1024xf32, #tpu.memory_space<vmem>>, vector<2x1024xf32>
    %cst = arith.constant 0.000000e+00 : f32
    %2 = arith.subf %cst, %0 : f32
    %3 = math.absf %1 : vector<2x1024xf32>
    %4 = vector.broadcast %2 : f32 to vector<2x1024xf32>
    %5 = arith.mulf %4, %3 : vector<2x1024xf32>
    %6 = math.exp %5 : vector<2x1024xf32>
    %c0_3 = arith.constant 0 : index
    %c0_4 = arith.constant 0 : index
    %7 = vector.load %arg3[%c0_3, %c0_4] : memref<2x1024xf32, #tpu.memory_space<vmem>>, vector<2x1024xf32>
    tpu.vector_store %arg3[%c0_3, %c0_4], %6 {strides = array<i32>} : memref<2x1024xf32, #tpu.memory_space<vmem>>, vector<2x1024xf32>,
    return
  }
  func.func @transform_0(%arg0: i32) -> (i32, i32) {
    %c0_i32 = arith.constant 0 : i32
    %c0_i32_0 = arith.constant 0 : i32
    %c0_i32_1 = arith.constant 0 : i32
    return %c0_i32, %c0_i32_0 : i32, i32
  }
  func.func @transform_1(%arg0: i32) -> (i32, i32) {
    %c0_i32 = arith.constant 0 : i32
    %c0_i32_0 = arith.constant 0 : i32
    return %arg0, %c0_i32 : i32, i32
  }
  func.func @transform_2(%arg0: i32) -> (i32, i32) {
    %c0_i32 = arith.constant 0 : i32
    %c0_i32_0 = arith.constant 0 : i32
    return %arg0, %c0_i32 : i32, i32
  }
}

</mosaic_0001>

<llo_original>
// kernel: tpu_custom_call.1
$region0: #{tpu_custom_call.1}
  #allocation0 [shape = 'u32[]', space=smem, size = 0x4, offset = 0x4, fixed_abs, tag = 'smem constant byte address 0x4 - core index']
  #allocation1 [shape = 'u32[72,128]{1,0:T(1,128)}', space=vmem, size = 0x9000, scoped, tag = 'internal scratch']
  #allocation2 [shape = 'f32[1,1]{1,0:T(1,128)S(6)}', space=smem, size = 0x200, scoped, tag = 'scoped memory for tpu_custom_call.1']
  %s0 = inlined_call_operand.<no memory space> [shape: f32[1,1], index: 0, kind: input, shape index: {}]
  %s1 = inlined_call_operand.hbm [shape: f32[2,1024], index: 1, kind: input, shape index: {}]
  %s2 = inlined_call_operand.hbm [shape: f32[2,1024], index: 2, kind: output, shape index: {}]
  %s3 = sld [smem:[#allocation0]]
  $region22: #{tpu_custom_call.1} parent=0
    _
  %s5 = ssub.s32 1, %s3
  %s6 = scalar_select 0, %s5, %s3
  %7 = sst [smem:[#allocation2]] %s0
  $region1: #{tpu_custom_call.1} parent=0
    #allocation3 [shape = 'u8[8192]{0}', space=vmem, size = 0x2000, scoped, tag = 'input window, operand 1, single buffered']
    #allocation4 [shape = 's32[1]{0}', space=sflag, size = 0x4, scoped, tag = 'scoped memory for tpu_custom_call.1']
    #allocation5 [shape = 's32[1]{0}', space=sflag, size = 0x4, scoped, tag = 'scoped memory for tpu_custom_call.1']
    #allocation6 [shape = 'u8[8192]{0}', space=vmem, size = 0x2000, scoped, tag = 'output window, operand 0, single buffered']
    %8 = vsyncpa [#allocation4], 0
    %9 = vsyncpa [#allocation5], 0
    // Predicated region
    $region2: #{tpu_custom_call.1} parent=1 // pred_check
      _
    $region3: #{tpu_custom_call.1} parent=1 // pred_check_branch
      %11 = sbr.rel (0) target = $region5
    $region4: #{tpu_custom_call.1} parent=1 // pred_region
      _
    $region5: #{tpu_custom_call.1} parent=1 // pred_fallthru
      _
    // Predicated region
    $region6: #{tpu_custom_call.1} parent=1 // pred_check
      _
    $region7: #{tpu_custom_call.1} parent=1 // pred_check_branch
      %13 = sbr.rel (0) target = $region9
    $region8: #{tpu_custom_call.1} parent=1 // pred_region
      %15 = vsyncadd [#allocation4], 0
      %s17 = sshll.u32 %s1, 4
      %s18 = int_to_ptr.hbm [resolvable:$true] %s17
      %s19 = sshll.u32 [#allocation3], 4
      %s20 = int_to_ptr.vmem [resolvable:$true] %s19
      %22 = dma.hbm_to_vmem [thread:$0]  %s18, 256, %s20, [#allocation4]
    $region9: #{tpu_custom_call.1} parent=1 // pred_fallthru
      _
    // Predicated region
    $region10: #{tpu_custom_call.1} parent=1 // pred_check
      _
    $region11: #{tpu_custom_call.1} parent=1 // pred_check_branch
      %24 = sbr.rel (0) target = $region13
    $region12: #{tpu_custom_call.1} parent=1 // pred_region
      %26 = dma.done [#allocation4], 256
    $region13: #{tpu_custom_call.1} parent=1 // pred_fallthru
      _
    %s27 = sld [smem:[#allocation2]]
    %v28 = vld [vmem:[#allocation3] sm:$0xff]
    %v29 = vld [vmem:[#allocation3 + $0x8] sm:$0xff]
    %s30 = ssub.f32 0.0, %s27
    %v31 = vand.u32 2147483647, %v28
    %v32 = vand.u32 2147483647, %v29
    %v33 = vstv %s30
    %v34 = vmul.f32 %v33, %v31
    %v35 = vmul.f32 %v33, %v32
    %v36 = vmul.f32 %v34, 1.442695
    %v37 = vpow.pop %v36
    %v38 = vmul.f32 %v35, 1.442695
    %v39 = vpow.pop %v38
    %40 = vst [vmem:[#allocation6] sm:$0xff] %v37
    %41 = vst [vmem:[#allocation6 + $0x8] sm:$0xff] %v39
    // Predicated region
    $region14: #{tpu_custom_call.1} parent=1 // pred_check
      _
    $region15: #{tpu_custom_call.1} parent=1 // pred_check_branch
      %43 = sbr.rel (0) target = $region17
    $region16: #{tpu_custom_call.1} parent=1 // pred_region
      %45 = vsyncadd [#allocation5], 0
      %s47 = sshll.u32 [#allocation6], 4
      %s48 = int_to_ptr.vmem [resolvable:$true] %s47
      %s49 = sshll.u32 %s2, 4
      %s50 = int_to_ptr.hbm [resolvable:$true] %s49
      %52 = dma.vmem_to_hbm [thread:$0]  %s48, 256, %s50, [#allocation5]
    $region17: #{tpu_custom_call.1} parent=1 // pred_fallthru
      _
    // Predicated region
    $region18: #{tpu_custom_call.1} parent=1 // pred_check
      _
    $region19: #{tpu_custom_call.1} parent=1 // pred_check_branch
      %54 = sbr.rel (0) target = $region21
    $region20: #{tpu_custom_call.1} parent=1 // pred_region
      %56 = dma.done [#allocation5], 256
    $region21: #{tpu_custom_call.1} parent=1 // pred_fallthru
      _
    %57 = vsyncpa [#allocation4], 1
    %58 = vsyncpa [#allocation5], 1

</llo_original>
